<compile_context>
chip_gen: v5e
topology: v5e:2x2
jax: 0.10.0
libtpu: 0.0.40
codegen_flags: <defaults>
</compile_context>

<pallas_src>
import functools

import jax
import jax.numpy as jnp
from jax.experimental import pallas as pl
from jax.experimental.pallas import tpu as pltpu


BN_EPS = 1e-5
_PARAM_ORDER = ("w1", "b1", "w2", "b2", "w3", "b3", "w4", "b4", "w5", "b5")


def _round_up(n, m):
    return ((n + m - 1) // m) * m


def _device_kind():
    try:
        return jax.devices()[0].device_kind.lower()
    except Exception:
        return ""


def _is_v5():
    return "v5" in _device_kind()


def _bf16_elementwise_ok():
    k = _device_kind()
    return ("v6" in k) or ("v7" in k) or ("7x" in k)


def _vmem_capacity_bytes():
    try:
        return int(pltpu.get_tpu_info().vmem_capacity_bytes)
    except Exception:
        return 64 * 1024 * 1024   # conservative: safe on every generation


def _gelu2(z, compute_dtype):
    """2*GELU(z) (tanh approximation).  The 0.5 is pre-folded into the next
    layer's weights; x*x is reused for the cubic term."""
    x = z.astype(compute_dtype)
    c = jnp.asarray(0.7978845608028654, compute_dtype)   # sqrt(2/pi)
    a = jnp.asarray(0.044715, compute_dtype)
    one = jnp.asarray(1.0, compute_dtype)
    x2 = x * x
    return x * (one + jnp.tanh(c * x * (one + a * x2)))


# ----------------------------------------------------------------------------
# Kernel A: everything resident in VMEM (weights single-buffered).
# ----------------------------------------------------------------------------
def _mlp_resident_kernel(x_ref, w1_ref, b1_ref, w2_ref, b2_ref, w3_ref, b3_ref,
                         w4_ref, b4_ref, w5_ref, b5_ref, o_ref,
                         *, gelu_dtype, act_dtype):
    def linear(h, w_ref, b_ref):
        # bf16 operands on the MXU, f32 accumulation, f32 bias add.
        return jnp.dot(h, w_ref[...], preferred_element_type=jnp.float32) + b_ref[...]

    h = x_ref[...]                                                   # bf16 in
    h = _gelu2(linear(h, w1_ref, b1_ref), gelu_dtype).astype(act_dtype)
    h = _gelu2(linear(h, w2_ref, b2_ref), gelu_dtype).astype(act_dtype)
    h = _gelu2(linear(h, w3_ref, b3_ref), gelu_dtype).astype(act_dtype)
    h = _gelu2(linear(h, w4_ref, b4_ref), gelu_dtype).astype(act_dtype)
    o_ref[...] = linear(h, w5_ref, b5_ref)                           # f32 out


# ----------------------------------------------------------------------------
# Kernel B: w2..w4 streamed from HBM in column tiles with a manual
# double-buffered DMA (for large hidden dims, e.g. v7x's 64 MiB VMEM).
# ----------------------------------------------------------------------------
def _mlp_stream_kernel(x_ref, w1_ref, b1_ref, b2_ref, b3_ref, b4_ref, b5_ref,
                       w5_ref, w2_hbm, w3_hbm, w4_hbm, o_ref,
                       act_a, act_b, wbuf, sem,
                       *, n_chunks, tn, gelu_dtype):
    # Ping-pong activation buffers: L1 -> a, L2 a->b, L3 b->a, L4 a->b, L5 reads b.
    layers = ((w2_hbm, b2_ref, act_a, act_b),
              (w3_hbm, b3_ref, act_b, act_a),
              (w4_hbm, b4_ref, act_a, act_b))
    tasks = [(w, b, src, dst, j)
             for (w, b, src, dst) in layers for j in range(n_chunks)]

    def dma(t, slot):
        w_hbm, _, _, _, j = tasks[t]
        return pltpu.make_async_copy(w_hbm.at[:, j * tn:(j + 1) * tn],
                                     wbuf.at[slot], sem.at[slot])

    # Prefetch the first streamed weight tile, overlapped with layer 1.
    dma(0, 0).start()
    z1 = jnp.dot(x_ref[...], w1_ref[...],
                 preferred_element_type=jnp.float32) + b1_ref[...]
    act_a[...] = _gelu2(z1, gelu_dtype).astype(act_a.dtype)

    for t in range(len(tasks)):          # static unroll (n_chunks is static)
        slot = t & 1
        _, b_ref, src, dst, j = tasks[t]
        dma(t, slot).wait()
        if t + 1 < len(tasks):
            dma(t + 1, 1 - slot).start()
        z = (jnp.dot(src[...], wbuf[slot], preferred_element_type=jnp.float32)
             + b_ref[...][:, j * tn:(j + 1) * tn])
        dst[:, j * tn:(j + 1) * tn] = _gelu2(z, gelu_dtype).astype(dst.dtype)

    o_ref[...] = (jnp.dot(act_b[...], w5_ref[...],
                          preferred_element_type=jnp.float32) + b5_ref[...])


# ----------------------------------------------------------------------------
# One-time host-side parameter preparation (NOT in the per-call hot path).
# ----------------------------------------------------------------------------
def prepare_params(params, *, matmul_dtype=jnp.bfloat16, large_lane_align=None):
    """Fold eval-mode BatchNorm *and* the GELU 0.5 factor into the next Linear,
    transpose weights to [in, out], pad feature dims (input only to a multiple
    of 8; hidden/out to 128, or 256 when large on v6e/v7x) and cast weights to
    the MXU operand dtype.  Biases stay float32."""
    if large_lane_align is None:
        large_lane_align = 128 if _is_v5() else 256   # 256-wide MXUs on v6e/v7x

    scale = params["bn_gamma"] * jax.lax.rsqrt(params["bn_var"] + BN_EPS)
    shift = params["bn_beta"] - params["bn_mean"] * scale

    in_dim = params["w1"].shape[1]
    hidden = params["w1"].shape[0]
    out_dim = params["w5"].shape[0]

    def lane_pad(d):
        return _round_up(d, large_lane_align if d >= 512 else 128)

    in_p = _round_up(in_dim, 8)     # no 8x lane inflation of the input
    hid_p = lane_pad(hidden)
    out_p = lane_pad(out_dim)

    def pad2(w, rows, cols):
        return jnp.pad(w, ((0, rows - w.shape[0]), (0, cols - w.shape[1])))

    def pad_row(b, cols):
        return jnp.pad(b, (0, cols - b.shape[0])).reshape(1, cols)

    prepped = {}
    # fc1 sees the raw input (no BN before it).
    prepped["w1"] = pad2(params["w1"].T, in_p, hid_p).astype(matmul_dtype)
    prepped["b1"] = pad_row(params["b1"], hid_p).astype(jnp.float32)

    # Layers 2..5 consume BN(GELU(prev)).  The kernel produces g = 2*GELU(prev):
    #   (0.5*g*scale + shift) @ W^T + b
    #     == g @ ((0.5*scale)[:,None] * W^T) + (shift @ W^T + b)
    # NOTE: scale is well-conditioned here (bn_var in [0.5,1.5]); if bn_var can
    # be tiny, clamp scale before the bf16 cast to avoid rounding amplification.
    half_scale = 0.5 * scale
    for name, (wk, bk, cols) in (("2", ("w2", "b2", hid_p)),
                                 ("3", ("w3", "b3", hid_p)),
                                 ("4", ("w4", "b4", hid_p)),
                                 ("5", ("w5", "b5", out_p))):
        wt = params[wk].T                           # [hidden, out_features]
        w_fold = half_scale[:, None] * wt
        b_fold = shift @ wt + params[bk]
        prepped["w" + name] = pad2(w_fold, hid_p, cols).astype(matmul_dtype)
        prepped["b" + name] = pad_row(b_fold, cols).astype(jnp.float32)
    return prepped


def _resident_spec(shape):
    """Grid-invariant VMEM block; single-buffered (weights never change)."""
    index_map = lambda i: (0,) * len(shape)
    try:
        return pl.BlockSpec(shape, index_map,
                            pipeline_mode=pl.Buffered(buffer_count=1))
    except TypeError:   # older jax without pipeline_mode / Buffered kwarg
        return pl.BlockSpec(shape, index_map)


# ----------------------------------------------------------------------------
# Per-call wrapper.
# ----------------------------------------------------------------------------
@functools.partial(jax.jit, static_argnames=("out_dim", "block_b", "force_stream"))
def simple_mlp_deeper(x, prepped, *, out_dim, block_b=None, force_stream=False):
    B, in_dim = x.shape
    in_p, hid_p = prepped["w1"].shape
    out_p = prepped["w5"].shape[1]

    if block_b is None:
        block_b = 128 if _is_v5() else 256   # v5e: 128-wide MXU + 16MiB default VMEM

    # Batch tiling: >=2 grid steps whenever possible so v7x's two TensorCores
    # both get work (harmless on 1-TC chips); tile capped at block_b.
    bp = _round_up(B, 8)
    tb = max(8, min(block_b, _round_up((bp + 1) // 2, 8)))
    bp = _round_up(bp, tb)

    # bf16 input, batch-padded only; feature dim padded at most to a multiple of 8.
    xp = jnp.pad(x.astype(jnp.bfloat16), ((0, bp - B), (0, in_p - in_dim)))

    gelu_dtype = jnp.bfloat16 if _bf16_elementwise_ok() else jnp.float32
    act_dtype = prepped["w1"].dtype

    weight_bytes = sum(int(prepped[k].size) * prepped[k].dtype.itemsize
                       for k in _PARAM_ORDER)
    vmem_cap = _vmem_capacity_bytes()
    io_bytes = 2 * (tb * in_p * 2 + tb * out_p * 4)       # double-buffered x / out
    use_stream = force_stream or (weight_bytes > int(0.45 * vmem_cap))

    x_spec = pl.BlockSpec((tb, in_p), lambda i: (i, 0))
    o_spec = pl.BlockSpec((tb, out_p), lambda i: (i, 0))
    grid = (bp // tb,)
    out_shape = jax.ShapeDtypeStruct((bp, out_p), jnp.float32)

    if not use_stream:
        temp_bytes = 4 * tb * hid_p * 4
        vmem_limit = int(min(max(vmem_cap - (2 << 20), 1 << 20),
                             max(24 << 20,
                                 weight_bytes + io_bytes + temp_bytes + (4 << 20))))
        in_specs = [x_spec] + [_resident_spec(prepped[k].shape) for k in _PARAM_ORDER]
        out = pl.pallas_call(
            functools.partial(_mlp_resident_kernel,
                              gelu_dtype=gelu_dtype, act_dtype=act_dtype),
            out_shape=out_shape,
            grid=grid,
            in_specs=in_specs,
            out_specs=o_spec,
            compiler_params=pltpu.CompilerParams(
                dimension_semantics=("parallel",),
                vmem_limit_bytes=vmem_limit),
        )(xp, *(prepped[k] for k in _PARAM_ORDER))
    else:
        # Stream the three hidden x hidden weights from HBM in column tiles.
        tn = 256 if hid_p % 256 == 0 else 128
        n_chunks = hid_p // tn
        resident_keys = ("w1", "b1", "b2", "b3", "b4", "b5", "w5")
        stream_keys = ("w2", "w3", "w4")
        resident_bytes = sum(int(prepped[k].size) * prepped[k].dtype.itemsize
                             for k in resident_keys)
        scratch_bytes = (2 * hid_p * tn * 2          # weight double buffer (bf16)
                         + 2 * tb * hid_p * 2)       # ping-pong activations (bf16)
        temp_bytes = 2 * tb * hid_p * 4
        vmem_limit = int(min(max(vmem_cap - (2 << 20), 1 << 20),
                             max(24 << 20, resident_bytes + scratch_bytes
                                 + io_bytes + temp_bytes + (4 << 20))))
        in_specs = ([x_spec]
                    + [_resident_spec(prepped[k].shape) for k in resident_keys]
                    + [pl.BlockSpec(memory_space=pl.ANY) for _ in stream_keys])
        out = pl.pallas_call(
            functools.partial(_mlp_stream_kernel, n_chunks=n_chunks, tn=tn,
                              gelu_dtype=gelu_dtype),
            out_shape=out_shape,
            grid=grid,
            in_specs=in_specs,
            out_specs=o_spec,
            scratch_shapes=[
                pltpu.VMEM((tb, hid_p), act_dtype),       # act_a
                pltpu.VMEM((tb, hid_p), act_dtype),       # act_b
                pltpu.VMEM((2, hid_p, tn), act_dtype),    # weight double buffer
                pltpu.SemaphoreType.DMA((2,)),
            ],
            compiler_params=pltpu.CompilerParams(
                dimension_semantics=("parallel",),
                vmem_limit_bytes=vmem_limit),
        )(xp, *(prepped[k] for k in resident_keys),
          *(prepped[k] for k in stream_keys))

    return out[:B, :out_dim]


# ----------------------------------------------------------------------------
# Deterministic init (mimics nn.Linear default) and pure-JAX reference.
# ----------------------------------------------------------------------------
def _init_params(key, input_dim, hidden_dim, output_dim):
    def linear(key, fan_in, fan_out):
        kw, kb = jax.random.split(key)
        bound = 1.0 / jnp.sqrt(fan_in)
        w = jax.random.uniform(kw, (fan_out, fan_in), jnp.float32, -bound, bound)
        b = jax.random.uniform(kb, (fan_out,), jnp.float32, -bound, bound)
        return w, b

    keys = jax.random.split(key, 8)
    w1, b1 = linear(keys[0], input_dim, hidden_dim)
    w2, b2 = linear(keys[1], hidden_dim, hidden_dim)
    w3, b3 = linear(keys[2], hidden_dim, hidden_dim)
    w4, b4 = linear(keys[3], hidden_dim, hidden_dim)
    w5, b5 = linear(keys[4], hidden_dim, output_dim)
    bn_gamma = 1.0 + 0.1 * jax.random.normal(keys[5], (hidden_dim,), jnp.float32)
    bn_beta = 0.1 * jax.random.normal(keys[6], (hidden_dim,), jnp.float32)
    bn_mean = 0.05 * jax.random.normal(keys[7], (hidden_dim,), jnp.float32)
    bn_var = jnp.linspace(0.5, 1.5, hidden_dim, dtype=jnp.float32)
    return dict(w1=w1, b1=b1, w2=w2, b2=b2, w3=w3, b3=b3, w4=w4, b4=b4,
                w5=w5, b5=b5, bn_gamma=bn_gamma, bn_beta=bn_beta,
                bn_mean=bn_mean, bn_var=bn_var)


def _reference(x, p):
    """Pure-JAX f32 reference of the eval-mode forward (exact erf GELU,
    un-folded BatchNorm, dropout = identity)."""
    scale = p["bn_gamma"] / jnp.sqrt(p["bn_var"] + BN_EPS)
    shift = p["bn_beta"] - p["bn_mean"] * scale
    gelu = lambda v: 0.5 * v * (1.0 + jax.scipy.special.erf(v * 0.7071067811865476))
    h = x
    for wk, bk in (("w1", "b1"), ("w2", "b2"), ("w3", "b3"), ("w4", "b4")):
        h = gelu(h @ p[wk].T + p[bk])
        h = h * scale + shift
    return h @ p["w5"].T + p["b5"]


if __name__ == "__main__":
    # TODO(synk): training-mode BatchNorm (batch statistics) and dropout RNG are
    # not implemented; this kernel covers the eval-mode forward pass.
    batch, input_dim, hidden_dim, output_dim = 16, 16, 32, 8

    key = jax.random.PRNGKey(0)
    kx, kp = jax.random.split(key)
    x = jax.random.normal(kx, (batch, input_dim), jnp.float32)
    params = _init_params(kp, input_dim, hidden_dim, output_dim)

    prepped = prepare_params(params)          # one-time host-side prep
    ref = _reference(x, params)

    # Default (resident-weight) path.
    out = jax.block_until_ready(simple_mlp_deeper(x, prepped, out_dim=output_dim))
    assert out.shape == (batch, output_dim)
    assert jnp.allclose(out, ref, rtol=2e-2, atol=2e-2), "resident path mismatch"

    # Also exercise the streamed-weight path (used automatically when the
    # weights do not fit resident in VMEM, e.g. large hidden dims on v7x).
    out_s = jax.block_until_ready(
        simple_mlp_deeper(x, prepped, out_dim=output_dim, force_stream=True))
    assert out_s.shape == (batch, output_dim)
    assert jnp.allclose(out_s, ref, rtol=2e-2, atol=2e-2), "streamed path mismatch"

    print("KERNEL_OK")
</pallas_src>

<mosaic_0001>
module attributes {stable_mosaic.version = 11 : i64} {
  func.func @_mlp_resident_kernel(%arg0: i32, %arg1: memref<8x16xbf16, #tpu.memory_space<vmem>>, %arg2: memref<16x128xbf16, #tpu.memory_space<vmem>>, %arg3: memref<1x128xf32, #tpu.memory_space<vmem>>, %arg4: memref<128x128xbf16, #tpu.memory_space<vmem>>, %arg5: memref<1x128xf32, #tpu.memory_space<vmem>>, %arg6: memref<128x128xbf16, #tpu.memory_space<vmem>>, %arg7: memref<1x128xf32, #tpu.memory_space<vmem>>, %arg8: memref<128x128xbf16, #tpu.memory_space<vmem>>, %arg9: memref<1x128xf32, #tpu.memory_space<vmem>>, %arg10: memref<128x128xbf16, #tpu.memory_space<vmem>>, %arg11: memref<1x128xf32, #tpu.memory_space<vmem>>, %arg12: memref<8x128xf32, #tpu.memory_space<vmem>>) attributes {dimension_semantics = [#tpu.dimension_semantics<parallel>], iteration_bounds = array<i64: 2>, scalar_prefetch = 0 : i64, scratch_operands = 0 : i64, tpu.core_type = #tpu.core_type<tc>, window_params = [{transform_indices = @transform_0, window_bounds = array<i64: 8, 16>}, {pipeline_mode = #tpu.pipeline_mode<synchronous>, transform_indices = @transform_1, window_bounds = array<i64: 16, 128>}, {pipeline_mode = #tpu.pipeline_mode<synchronous>, transform_indices = @transform_2, window_bounds = array<i64: 1, 128>}, {pipeline_mode = #tpu.pipeline_mode<synchronous>, transform_indices = @transform_3, window_bounds = array<i64: 128, 128>}, {pipeline_mode = #tpu.pipeline_mode<synchronous>, transform_indices = @transform_4, window_bounds = array<i64: 1, 128>}, {pipeline_mode = #tpu.pipeline_mode<synchronous>, transform_indices = @transform_5, window_bounds = array<i64: 128, 128>}, {pipeline_mode = #tpu.pipeline_mode<synchronous>, transform_indices = @transform_6, window_bounds = array<i64: 1, 128>}, {pipeline_mode = #tpu.pipeline_mode<synchronous>, transform_indices = @transform_7, window_bounds = array<i64: 128, 128>}, {pipeline_mode = #tpu.pipeline_mode<synchronous>, transform_indices = @transform_8, window_bounds = array<i64: 1, 128>}, {pipeline_mode = #tpu.pipeline_mode<synchronous>, transform_indices = @transform_9, window_bounds = array<i64: 128, 128>}, {pipeline_mode = #tpu.pipeline_mode<synchronous>, transform_indices = @transform_10, window_bounds = array<i64: 1, 128>}, {transform_indices = @transform_11, window_bounds = array<i64: 8, 128>}]} {
    %c0 = arith.constant 0 : index
    %c0_0 = arith.constant 0 : index
    %0 = vector.load %arg1[%c0, %c0_0] : memref<8x16xbf16, #tpu.memory_space<vmem>>, vector<8x16xbf16>
    %c0_1 = arith.constant 0 : index
    %c0_2 = arith.constant 0 : index
    %1 = vector.load %arg2[%c0_1, %c0_2] : memref<16x128xbf16, #tpu.memory_space<vmem>>, vector<16x128xbf16>
    %cst = arith.constant dense<0.000000e+00> : vector<8x128xf32>
    %2 = tpu.matmul %0, %1, %cst {dimension_numbers = #tpu.dot_dimension_numbers<[1], [0], [0], [1], [0, 0, 1, 1], [], []>} : vector<8x16xbf16>, vector<16x128xbf16>, vector<8x128xf32> -> vector<8x128xf32>
    %c0_3 = arith.constant 0 : index
    %c0_4 = arith.constant 0 : index
    %3 = vector.load %arg3[%c0_3, %c0_4] : memref<1x128xf32, #tpu.memory_space<vmem>>, vector<1x128xf32>
    %4 = vector.broadcast %3 : vector<1x128xf32> to vector<8x128xf32>
    %5 = arith.addf %2, %4 : vector<8x128xf32>
    %6 = arith.mulf %5, %5 : vector<8x128xf32>
    %cst_5 = arith.constant 0.797884583 : f32
    %7 = vector.broadcast %cst_5 : f32 to vector<8x128xf32>
    %8 = arith.mulf %7, %5 : vector<8x128xf32>
    %cst_6 = arith.constant 4.471500e-02 : f32
    %9 = vector.broadcast %cst_6 : f32 to vector<8x128xf32>
    %10 = arith.mulf %9, %6 : vector<8x128xf32>
    %cst_7 = arith.constant 1.000000e+00 : f32
    %11 = vector.broadcast %cst_7 : f32 to vector<8x128xf32>
    %12 = arith.addf %11, %10 : vector<8x128xf32>
    %13 = arith.mulf %8, %12 : vector<8x128xf32>
    %14 = math.tanh %13 : vector<8x128xf32>
    %cst_8 = arith.constant 1.000000e+00 : f32
    %15 = vector.broadcast %cst_8 : f32 to vector<8x128xf32>
    %16 = arith.addf %15, %14 : vector<8x128xf32>
    %17 = arith.mulf %5, %16 : vector<8x128xf32>
    %18 = arith.truncf %17 : vector<8x128xf32> to vector<8x128xbf16>
    %c0_9 = arith.constant 0 : index
    %c0_10 = arith.constant 0 : index
    %19 = vector.load %arg4[%c0_9, %c0_10] : memref<128x128xbf16, #tpu.memory_space<vmem>>, vector<128x128xbf16>
    %cst_11 = arith.constant dense<0.000000e+00> : vector<8x128xf32>
    %20 = tpu.matmul %18, %19, %cst_11 {dimension_numbers = #tpu.dot_dimension_numbers<[1], [0], [0], [1], [0, 0, 1, 1], [], []>} : vector<8x128xbf16>, vector<128x128xbf16>, vector<8x128xf32> -> vector<8x128xf32>
    %c0_12 = arith.constant 0 : index
    %c0_13 = arith.constant 0 : index
    %21 = vector.load %arg5[%c0_12, %c0_13] : memref<1x128xf32, #tpu.memory_space<vmem>>, vector<1x128xf32>
    %22 = vector.broadcast %21 : vector<1x128xf32> to vector<8x128xf32>
    %23 = arith.addf %20, %22 : vector<8x128xf32>
    %24 = arith.mulf %23, %23 : vector<8x128xf32>
    %cst_14 = arith.constant 0.797884583 : f32
    %25 = vector.broadcast %cst_14 : f32 to vector<8x128xf32>
    %26 = arith.mulf %25, %23 : vector<8x128xf32>
    %cst_15 = arith.constant 4.471500e-02 : f32
    %27 = vector.broadcast %cst_15 : f32 to vector<8x128xf32>
    %28 = arith.mulf %27, %24 : vector<8x128xf32>
    %cst_16 = arith.constant 1.000000e+00 : f32
    %29 = vector.broadcast %cst_16 : f32 to vector<8x128xf32>
    %30 = arith.addf %29, %28 : vector<8x128xf32>
    %31 = arith.mulf %26, %30 : vector<8x128xf32>
    %32 = math.tanh %31 : vector<8x128xf32>
    %cst_17 = arith.constant 1.000000e+00 : f32
    %33 = vector.broadcast %cst_17 : f32 to vector<8x128xf32>
    %34 = arith.addf %33, %32 : vector<8x128xf32>
    %35 = arith.mulf %23, %34 : vector<8x128xf32>
    %36 = arith.truncf %35 : vector<8x128xf32> to vector<8x128xbf16>
    %c0_18 = arith.constant 0 : index
    %c0_19 = arith.constant 0 : index
    %37 = vector.load %arg6[%c0_18, %c0_19] : memref<128x128xbf16, #tpu.memory_space<vmem>>, vector<128x128xbf16>
    %cst_20 = arith.constant dense<0.000000e+00> : vector<8x128xf32>
    %38 = tpu.matmul %36, %37, %cst_20 {dimension_numbers = #tpu.dot_dimension_numbers<[1], [0], [0], [1], [0, 0, 1, 1], [], []>} : vector<8x128xbf16>, vector<128x128xbf16>, vector<8x128xf32> -> vector<8x128xf32>
    %c0_21 = arith.constant 0 : index
    %c0_22 = arith.constant 0 : index
    %39 = vector.load %arg7[%c0_21, %c0_22] : memref<1x128xf32, #tpu.memory_space<vmem>>, vector<1x128xf32>
    %40 = vector.broadcast %39 : vector<1x128xf32> to vector<8x128xf32>
    %41 = arith.addf %38, %40 : vector<8x128xf32>
    %42 = arith.mulf %41, %41 : vector<8x128xf32>
    %cst_23 = arith.constant 0.797884583 : f32
    %43 = vector.broadcast %cst_23 : f32 to vector<8x128xf32>
    %44 = arith.mulf %43, %41 : vector<8x128xf32>
    %cst_24 = arith.constant 4.471500e-02 : f32
    %45 = vector.broadcast %cst_24 : f32 to vector<8x128xf32>
    %46 = arith.mulf %45, %42 : vector<8x128xf32>
    %cst_25 = arith.constant 1.000000e+00 : f32
    %47 = vector.broadcast %cst_25 : f32 to vector<8x128xf32>
    %48 = arith.addf %47, %46 : vector<8x128xf32>
    %49 = arith.mulf %44, %48 : vector<8x128xf32>
    %50 = math.tanh %49 : vector<8x128xf32>
    %cst_26 = arith.constant 1.000000e+00 : f32
    %51 = vector.broadcast %cst_26 : f32 to vector<8x128xf32>
    %52 = arith.addf %51, %50 : vector<8x128xf32>
    %53 = arith.mulf %41, %52 : vector<8x128xf32>
    %54 = arith.truncf %53 : vector<8x128xf32> to vector<8x128xbf16>
    %c0_27 = arith.constant 0 : index
    %c0_28 = arith.constant 0 : index
    %55 = vector.load %arg8[%c0_27, %c0_28] : memref<128x128xbf16, #tpu.memory_space<vmem>>, vector<128x128xbf16>
    %cst_29 = arith.constant dense<0.000000e+00> : vector<8x128xf32>
    %56 = tpu.matmul %54, %55, %cst_29 {dimension_numbers = #tpu.dot_dimension_numbers<[1], [0], [0], [1], [0, 0, 1, 1], [], []>} : vector<8x128xbf16>, vector<128x128xbf16>, vector<8x128xf32> -> vector<8x128xf32>
    %c0_30 = arith.constant 0 : index
    %c0_31 = arith.constant 0 : index
    %57 = vector.load %arg9[%c0_30, %c0_31] : memref<1x128xf32, #tpu.memory_space<vmem>>, vector<1x128xf32>
    %58 = vector.broadcast %57 : vector<1x128xf32> to vector<8x128xf32>
    %59 = arith.addf %56, %58 : vector<8x128xf32>
    %60 = arith.mulf %59, %59 : vector<8x128xf32>
    %cst_32 = arith.constant 0.797884583 : f32
    %61 = vector.broadcast %cst_32 : f32 to vector<8x128xf32>
    %62 = arith.mulf %61, %59 : vector<8x128xf32>
    %cst_33 = arith.constant 4.471500e-02 : f32
    %63 = vector.broadcast %cst_33 : f32 to vector<8x128xf32>
    %64 = arith.mulf %63, %60 : vector<8x128xf32>
    %cst_34 = arith.constant 1.000000e+00 : f32
    %65 = vector.broadcast %cst_34 : f32 to vector<8x128xf32>
    %66 = arith.addf %65, %64 : vector<8x128xf32>
    %67 = arith.mulf %62, %66 : vector<8x128xf32>
    %68 = math.tanh %67 : vector<8x128xf32>
    %cst_35 = arith.constant 1.000000e+00 : f32
    %69 = vector.broadcast %cst_35 : f32 to vector<8x128xf32>
    %70 = arith.addf %69, %68 : vector<8x128xf32>
    %71 = arith.mulf %59, %70 : vector<8x128xf32>
    %72 = arith.truncf %71 : vector<8x128xf32> to vector<8x128xbf16>
    %c0_36 = arith.constant 0 : index
    %c0_37 = arith.constant 0 : index
    %73 = vector.load %arg10[%c0_36, %c0_37] : memref<128x128xbf16, #tpu.memory_space<vmem>>, vector<128x128xbf16>
    %cst_38 = arith.constant dense<0.000000e+00> : vector<8x128xf32>
    %74 = tpu.matmul %72, %73, %cst_38 {dimension_numbers = #tpu.dot_dimension_numbers<[1], [0], [0], [1], [0, 0, 1, 1], [], []>} : vector<8x128xbf16>, vector<128x128xbf16>, vector<8x128xf32> -> vector<8x128xf32>
    %c0_39 = arith.constant 0 : index
    %c0_40 = arith.constant 0 : index
    %75 = vector.load %arg11[%c0_39, %c0_40] : memref<1x128xf32, #tpu.memory_space<vmem>>, vector<1x128xf32>
    %76 = vector.broadcast %75 : vector<1x128xf32> to vector<8x128xf32>
    %77 = arith.addf %74, %76 : vector<8x128xf32>
    %c0_41 = arith.constant 0 : index
    %c0_42 = arith.constant 0 : index
    %78 = vector.load %arg12[%c0_41, %c0_42] : memref<8x128xf32, #tpu.memory_space<vmem>>, vector<8x128xf32>
    tpu.vector_store %arg12[%c0_41, %c0_42], %77 {strides = array<i32>} : memref<8x128xf32, #tpu.memory_space<vmem>>, vector<8x128xf32>,
    return
  }
  func.func @transform_0(%arg0: i32) -> (i32, i32) {
    %c0_i32 = arith.constant 0 : i32
    %c0_i32_0 = arith.constant 0 : i32
    return %arg0, %c0_i32 : i32, i32
  }
  func.func @transform_1(%arg0: i32) -> (i32, i32) {
    %c0_i32 = arith.constant 0 : i32
    %c0_i32_0 = arith.constant 0 : i32
    %c0_i32_1 = arith.constant 0 : i32
    return %c0_i32, %c0_i32_0 : i32, i32
  }
  func.func @transform_2(%arg0: i32) -> (i32, i32) {
    %c0_i32 = arith.constant 0 : i32
    %c0_i32_0 = arith.constant 0 : i32
    %c0_i32_1 = arith.constant 0 : i32
    return %c0_i32, %c0_i32_0 : i32, i32
  }
  func.func @transform_3(%arg0: i32) -> (i32, i32) {
    %c0_i32 = arith.constant 0 : i32
    %c0_i32_0 = arith.constant 0 : i32
    %c0_i32_1 = arith.constant 0 : i32
    return %c0_i32, %c0_i32_0 : i32, i32
  }
  func.func @transform_4(%arg0: i32) -> (i32, i32) {
    %c0_i32 = arith.constant 0 : i32
    %c0_i32_0 = arith.constant 0 : i32
    %c0_i32_1 = arith.constant 0 : i32
    return %c0_i32, %c0_i32_0 : i32, i32
  }
  func.func @transform_5(%arg0: i32) -> (i32, i32) {
    %c0_i32 = arith.constant 0 : i32
    %c0_i32_0 = arith.constant 0 : i32
    %c0_i32_1 = arith.constant 0 : i32
    return %c0_i32, %c0_i32_0 : i32, i32
  }
  func.func @transform_6(%arg0: i32) -> (i32, i32) {
    %c0_i32 = arith.constant 0 : i32
    %c0_i32_0 = arith.constant 0 : i32
    %c0_i32_1 = arith.constant 0 : i32
    return %c0_i32, %c0_i32_0 : i32, i32
  }
  func.func @transform_7(%arg0: i32) -> (i32, i32) {
    %c0_i32 = arith.constant 0 : i32
    %c0_i32_0 = arith.constant 0 : i32
    %c0_i32_1 = arith.constant 0 : i32
    return %c0_i32, %c0_i32_0 : i32, i32
  }
  func.func @transform_8(%arg0: i32) -> (i32, i32) {
    %c0_i32 = arith.constant 0 : i32
    %c0_i32_0 = arith.constant 0 : i32
    %c0_i32_1 = arith.constant 0 : i32
    return %c0_i32, %c0_i32_0 : i32, i32
  }
  func.func @transform_9(%arg0: i32) -> (i32, i32) {
    %c0_i32 = arith.constant 0 : i32
    %c0_i32_0 = arith.constant 0 : i32
    %c0_i32_1 = arith.constant 0 : i32
    return %c0_i32, %c0_i32_0 : i32, i32
  }
  func.func @transform_10(%arg0: i32) -> (i32, i32) {
    %c0_i32 = arith.constant 0 : i32
    %c0_i32_0 = arith.constant 0 : i32
    %c0_i32_1 = arith.constant 0 : i32
    return %c0_i32, %c0_i32_0 : i32, i32
  }
  func.func @transform_11(%arg0: i32) -> (i32, i32) {
    %c0_i32 = arith.constant 0 : i32
    %c0_i32_0 = arith.constant 0 : i32
    return %arg0, %c0_i32 : i32, i32
  }
}

</mosaic_0001>

<llo_original>
// kernel: simple_mlp_deeper.1
$region0: #{simple_mlp_deeper.1}
  #allocation0 [shape = 'u32[]', space=smem, size = 0x4, offset = 0x4, fixed_abs, tag = 'smem constant byte address 0x4 - core index']
  #allocation1 [shape = 'u32[72,128]{1,0:T(1,128)}', space=vmem, size = 0x9000, scoped, tag = 'internal scratch']
  %s0 = inlined_call_operand.vmem [shape: bf16[16,16], index: 0, kind: input, shape index: {}]
  %s1 = inlined_call_operand.vmem [shape: bf16[16,128], index: 1, kind: input, shape index: {}]
  %s2 = inlined_call_operand.vmem [shape: f32[1,128], index: 2, kind: input, shape index: {}]
  %s3 = inlined_call_operand.hbm [shape: bf16[128,128], index: 3, kind: input, shape index: {}]
  %s4 = inlined_call_operand.vmem [shape: f32[1,128], index: 4, kind: input, shape index: {}]
  %s5 = inlined_call_operand.hbm [shape: bf16[128,128], index: 5, kind: input, shape index: {}]
  %s6 = inlined_call_operand.vmem [shape: f32[1,128], index: 6, kind: input, shape index: {}]
  %s7 = inlined_call_operand.hbm [shape: bf16[128,128], index: 7, kind: input, shape index: {}]
  %s8 = inlined_call_operand.vmem [shape: f32[1,128], index: 8, kind: input, shape index: {}]
  %s9 = inlined_call_operand.hbm [shape: bf16[128,128], index: 9, kind: input, shape index: {}]
  %s10 = inlined_call_operand.vmem [shape: f32[1,128], index: 10, kind: input, shape index: {}]
  %s11 = inlined_call_operand.vmem [shape: f32[16,128], index: 11, kind: output, shape index: {}]
  %s12 = sld [smem:[#allocation0]]
  $region93: #{simple_mlp_deeper.1} parent=0
    _
  %s14 = ssub.s32 1, %s12
  %s15 = scalar_select 0, %s14, %s12
  $region1: #{simple_mlp_deeper.1} parent=0
    #allocation2 [shape = 'u8[32768]{0}', space=vmem, size = 0x8000, scoped, tag = 'input window, operand 3, single buffered']
    #allocation3 [shape = 's32[2]{0}', space=sflag, size = 0x8, scoped, tag = 'scoped memory for simple_mlp_deeper.1']
    #allocation4 [shape = 'u8[32768]{0}', space=vmem, size = 0x8000, scoped, tag = 'input window, operand 5, single buffered']
    #allocation5 [shape = 's32[1]{0}', space=sflag, size = 0x4, scoped, tag = 'scoped memory for simple_mlp_deeper.1']
    #allocation6 [shape = 'u8[32768]{0}', space=vmem, size = 0x8000, scoped, tag = 'input window, operand 7, single buffered']
    #allocation7 [shape = 'u8[32768]{0}', space=vmem, size = 0x8000, scoped, tag = 'input window, operand 9, single buffered']
    #allocation8 [shape = 's32[1]{0}', space=sflag, size = 0x4, scoped, tag = 'scoped memory for simple_mlp_deeper.1']
    %16 = vsyncpa [#allocation3], 0
    %17 = vsyncpa [#allocation5], 0
    %18 = vsyncpa [#allocation8], 0
    loop: start=0, step=1, limit=4
    $region2: #{simple_mlp_deeper.1} parent=1 // loop_pre_header
      _
    $region3: #{simple_mlp_deeper.1} parent=1 // loop_header
      %s20 = sphi 0, %s24
      %p21 = scmp.ge.s32.totalorder %s20, 4
      %s30 = sphi 0, %s32
      %s33 = sphi 0, %s30
      %s34 = sphi 0, %s33
      %s50 = sphi 0, %s34
      %s54 = sphi 0, %s54
      %s56 = sphi 0, %s54
      %s57 = sphi 0, %s56
      %s71 = sphi 0, %s57
      %s75 = sphi 0, %s75
      %s77 = sphi 0, %s75
      %s78 = sphi 0, %s77
      %s92 = sphi 0, %s78
      %s96 = sphi 0, %s96
      %s98 = sphi 0, %s96
      %s99 = sphi 0, %s98
      %s113 = sphi 0, %s99
      %s117 = sphi 0, %s117
      %s119 = sphi 0, %s117
      %s120 = sphi 0, %s119
      %s134 = sphi 0, %s120
      %s138 = sphi 0, %s138
      %s140 = sphi 0, %s138
      %s141 = sphi 0, %s140
      %s155 = sphi 0, %s141
      %s159 = sphi 0, %s159
      %s161 = sphi 0, %s159
      %s162 = sphi 0, %s161
      %s176 = sphi 0, %s162
      %s180 = sphi 0, %s180
      %s182 = sphi 0, %s180
      %s183 = sphi 0, %s182
      %s197 = sphi 0, %s183
      %s201 = sphi 0, %s201
      %s203 = sphi 0, %s201
      %s204 = sphi 0, %s203
      %s218 = sphi 0, %s204
      %s222 = sphi 0, %s222
      %s224 = sphi 0, %s222
      %s225 = sphi 0, %s224
      %s239 = sphi 0, %s225
      %s243 = sphi 0, %s243
      %s245 = sphi 0, %s243
      %s246 = sphi 0, %s245
      %s260 = sphi 0, %s246
      %s266 = sphi 0, %s268
      %s269 = sphi 0, %s266
      %s270 = sphi 0, %s269
      %s286 = sphi 0, %s270
    $region4: #{simple_mlp_deeper.1} parent=1 // loop_header_branch
      %23 = sbr.rel (%p21) target = $region8
    $region5: #{simple_mlp_deeper.1} parent=1 // loop_body
      %s25 = ssub.s32 %s20, 1
      %s26 = ssub.s32 %s20, 2
      %s27 = sadd.s32 %s20, 1
      %s28 = ssub.s32 %s20, %s27
      %p29 = scmp.eq.s32.totalorder %s28, 0
      %s31 = sadd.s32 %s30, 1
      %s32 = scalar_select %p29, %s30, %s31
      %p35 = pneg %p29
      %p36 = scmp.eq.s32.totalorder %s20, 1
      %p37 = por %p35, %p36
      %p38 = scmp.ne.s32.totalorder %s30, %s33
      %p39 = scmp.eq.s32.totalorder %s20, 0
      %p40 = por %p38, %p39
      %p41 = scmp.ne.s32.totalorder %s30, %s33
      %p42 = scmp.eq.s32.totalorder %s25, 1
      %p43 = por %p41, %p42
      %p44 = scmp.ne.s32.totalorder %s33, %s34
      %p45 = scmp.eq.s32.totalorder %s25, 0
      %p46 = por %p44, %p45
      %p47 = scmp.ne.s32.totalorder %s33, %s34
      %p48 = scmp.eq.s32.totalorder %s26, 1
      %p49 = por %p47, %p48
      %p51 = scmp.ne.s32.totalorder %s34, %s50
      %p52 = scmp.eq.s32.totalorder %s26, 0
      %p53 = por %p51, %p52
      %s55 = sadd.s32 %s54, 1
      %p58 = scmp.eq.s32.totalorder %s20, 1
      %p59 = scmp.ne.s32.totalorder %s54, %s56
      %p60 = scmp.eq.s32.totalorder %s20, 0
      %p61 = por %p59, %p60
      %p62 = scmp.ne.s32.totalorder %s54, %s56
      %p63 = scmp.eq.s32.totalorder %s25, 1
      %p64 = por %p62, %p63
      %p65 = scmp.ne.s32.totalorder %s56, %s57
      %p66 = scmp.eq.s32.totalorder %s25, 0
      %p67 = por %p65, %p66
      %p68 = scmp.ne.s32.totalorder %s56, %s57
      %p69 = scmp.eq.s32.totalorder %s26, 1
      %p70 = por %p68, %p69
      %p72 = scmp.ne.s32.totalorder %s57, %s71
      %p73 = scmp.eq.s32.totalorder %s26, 0
      %p74 = por %p72, %p73
      %s76 = sadd.s32 %s75, 1
      %p79 = scmp.eq.s32.totalorder %s20, 1
      %p80 = scmp.ne.s32.totalorder %s75, %s77
      %p81 = scmp.eq.s32.totalorder %s20, 0
      %p82 = por %p80, %p81
      %p83 = scmp.ne.s32.totalorder %s75, %s77
      %p84 = scmp.eq.s32.totalorder %s25, 1
      %p85 = por %p83, %p84
      %p86 = scmp.ne.s32.totalorder %s77, %s78
      %p87 = scmp.eq.s32.totalorder %s25, 0
      %p88 = por %p86, %p87
      %p89 = scmp.ne.s32.totalorder %s77, %s78
      %p90 = scmp.eq.s32.totalorder %s26, 1
      %p91 = por %p89, %p90
      %p93 = scmp.ne.s32.totalorder %s78, %s92
      %p94 = scmp.eq.s32.totalorder %s26, 0
      %p95 = por %p93, %p94
      %s97 = sadd.s32 %s96, 1
      %p100 = scmp.eq.s32.totalorder %s20, 1
      %p101 = scmp.ne.s32.totalorder %s96, %s98
      %p102 = scmp.eq.s32.totalorder %s20, 0
      %p103 = por %p101, %p102
      %p104 = scmp.ne.s32.totalorder %s96, %s98
      %p105 = scmp.eq.s32.totalorder %s25, 1
      %p106 = por %p104, %p105
      %p107 = scmp.ne.s32.totalorder %s98, %s99
      %p108 = scmp.eq.s32.totalorder %s25, 0
      %p109 = por %p107, %p108
      %p110 = scmp.ne.s32.totalorder %s98, %s99
      %p111 = scmp.eq.s32.totalorder %s26, 1
      %p112 = por %p110, %p111
      %p114 = scmp.ne.s32.totalorder %s99, %s113
      %p115 = scmp.eq.s32.totalorder %s26, 0
      %p116 = por %p114, %p115
      %s118 = sadd.s32 %s117, 1
      %p121 = scmp.eq.s32.totalorder %s20, 1
      %p122 = scmp.ne.s32.totalorder %s117, %s119
      %p123 = scmp.eq.s32.totalorder %s20, 0
      %p124 = por %p122, %p123
      %p125 = scmp.ne.s32.totalorder %s117, %s119
      %p126 = scmp.eq.s32.totalorder %s25, 1
      %p127 = por %p125, %p126
      %p128 = scmp.ne.s32.totalorder %s119, %s120
      %p129 = scmp.eq.s32.totalorder %s25, 0
      %p130 = por %p128, %p129
      %p131 = scmp.ne.s32.totalorder %s119, %s120
      %p132 = scmp.eq.s32.totalorder %s26, 1
      %p133 = por %p131, %p132
      %p135 = scmp.ne.s32.totalorder %s120, %s134
      %p136 = scmp.eq.s32.totalorder %s26, 0
      %p137 = por %p135, %p136
      %s139 = sadd.s32 %s138, 1
      %p142 = scmp.eq.s32.totalorder %s20, 1
      %p143 = scmp.ne.s32.totalorder %s138, %s140
      %p144 = scmp.eq.s32.totalorder %s20, 0
      %p145 = por %p143, %p144
      %p146 = scmp.ne.s32.totalorder %s138, %s140
      %p147 = scmp.eq.s32.totalorder %s25, 1
      %p148 = por %p146, %p147
      %p149 = scmp.ne.s32.totalorder %s140, %s141
      %p150 = scmp.eq.s32.totalorder %s25, 0
      %p151 = por %p149, %p150
      %p152 = scmp.ne.s32.totalorder %s140, %s141
      %p153 = scmp.eq.s32.totalorder %s26, 1
      %p154 = por %p152, %p153
      %p156 = scmp.ne.s32.totalorder %s141, %s155
      %p157 = scmp.eq.s32.totalorder %s26, 0
      %p158 = por %p156, %p157
      %s160 = sadd.s32 %s159, 1
      %p163 = scmp.eq.s32.totalorder %s20, 1
      %p164 = scmp.ne.s32.totalorder %s159, %s161
      %p165 = scmp.eq.s32.totalorder %s20, 0
      %p166 = por %p164, %p165
      %p167 = scmp.ne.s32.totalorder %s159, %s161
      %p168 = scmp.eq.s32.totalorder %s25, 1
      %p169 = por %p167, %p168
      %p170 = scmp.ne.s32.totalorder %s161, %s162
      %p171 = scmp.eq.s32.totalorder %s25, 0
      %p172 = por %p170, %p171
      %p173 = scmp.ne.s32.totalorder %s161, %s162
      %p174 = scmp.eq.s32.totalorder %s26, 1
      %p175 = por %p173, %p174
      %p177 = scmp.ne.s32.totalorder %s162, %s176
      %p178 = scmp.eq.s32.totalorder %s26, 0
      %p179 = por %p177, %p178
      %s181 = sadd.s32 %s180, 1
      %p184 = scmp.eq.s32.totalorder %s20, 1
      %p185 = scmp.ne.s32.totalorder %s180, %s182
      %p186 = scmp.eq.s32.totalorder %s20, 0
      %p187 = por %p185, %p186
      %p188 = scmp.ne.s32.totalorder %s180, %s182
      %p189 = scmp.eq.s32.totalorder %s25, 1
      %p190 = por %p188, %p189
      %p191 = scmp.ne.s32.totalorder %s182, %s183
      %p192 = scmp.eq.s32.totalorder %s25, 0
      %p193 = por %p191, %p192
      %p194 = scmp.ne.s32.totalorder %s182, %s183
      %p195 = scmp.eq.s32.totalorder %s26, 1
      %p196 = por %p194, %p195
      %p198 = scmp.ne.s32.totalorder %s183, %s197
      %p199 = scmp.eq.s32.totalorder %s26, 0
      %p200 = por %p198, %p199
      %s202 = sadd.s32 %s201, 1
      %p205 = scmp.eq.s32.totalorder %s20, 1
      %p206 = scmp.ne.s32.totalorder %s201, %s203
      %p207 = scmp.eq.s32.totalorder %s20, 0
      %p208 = por %p206, %p207
      %p209 = scmp.ne.s32.totalorder %s201, %s203
      %p210 = scmp.eq.s32.totalorder %s25, 1
      %p211 = por %p209, %p210
      %p212 = scmp.ne.s32.totalorder %s203, %s204
      %p213 = scmp.eq.s32.totalorder %s25, 0
      %p214 = por %p212, %p213
      %p215 = scmp.ne.s32.totalorder %s203, %s204
      %p216 = scmp.eq.s32.totalorder %s26, 1
      %p217 = por %p215, %p216
      %p219 = scmp.ne.s32.totalorder %s204, %s218
      %p220 = scmp.eq.s32.totalorder %s26, 0
      %p221 = por %p219, %p220
      %s223 = sadd.s32 %s222, 1
      %p226 = scmp.eq.s32.totalorder %s20, 1
      %p227 = scmp.ne.s32.totalorder %s222, %s224
      %p228 = scmp.eq.s32.totalorder %s20, 0
      %p229 = por %p227, %p228
      %p230 = scmp.ne.s32.totalorder %s222, %s224
      %p231 = scmp.eq.s32.totalorder %s25, 1
      %p232 = por %p230, %p231
      %p233 = scmp.ne.s32.totalorder %s224, %s225
      %p234 = scmp.eq.s32.totalorder %s25, 0
      %p235 = por %p233, %p234
      %p236 = scmp.ne.s32.totalorder %s224, %s225
      %p237 = scmp.eq.s32.totalorder %s26, 1
      %p238 = por %p236, %p237
      %p240 = scmp.ne.s32.totalorder %s225, %s239
      %p241 = scmp.eq.s32.totalorder %s26, 0
      %p242 = por %p240, %p241
      %s244 = sadd.s32 %s243, 1
      %p247 = scmp.eq.s32.totalorder %s20, 1
      %p248 = scmp.ne.s32.totalorder %s243, %s245
      %p249 = scmp.eq.s32.totalorder %s20, 0
      %p250 = por %p248, %p249
      %p251 = scmp.ne.s32.totalorder %s243, %s245
      %p252 = scmp.eq.s32.totalorder %s25, 1
      %p253 = por %p251, %p252
      %p254 = scmp.ne.s32.totalorder %s245, %s246
      %p255 = scmp.eq.s32.totalorder %s25, 0
      %p256 = por %p254, %p255
      %p257 = scmp.ne.s32.totalorder %s245, %s246
      %p258 = scmp.eq.s32.totalorder %s26, 1
      %p259 = por %p257, %p258
      %p261 = scmp.ne.s32.totalorder %s246, %s260
      %p262 = scmp.eq.s32.totalorder %s26, 0
      %p263 = por %p261, %p262
      %s264 = ssub.s32 %s20, %s27
      %p265 = scmp.eq.s32.totalorder %s264, 0
      %s267 = sadd.s32 %s266, 1
      %s268 = scalar_select %p265, %s266, %s267
      %p271 = pneg %p265
      %p272 = scmp.eq.s32.totalorder %s20, 1
      %p273 = por %p271, %p272
      %p274 = scmp.ne.s32.totalorder %s266, %s269
      %p275 = scmp.eq.s32.totalorder %s20, 0
      %p276 = por %p274, %p275
      %p277 = scmp.ne.s32.totalorder %s266, %s269
      %p278 = scmp.eq.s32.totalorder %s25, 1
      %p279 = por %p277, %p278
      %p280 = scmp.ne.s32.totalorder %s269, %s270
      %p281 = scmp.eq.s32.totalorder %s25, 0
      %p282 = por %p280, %p281
      %p283 = scmp.ne.s32.totalorder %s269, %s270
      %p284 = scmp.eq.s32.totalorder %s26, 1
      %p285 = por %p283, %p284
      %p287 = scmp.ne.s32.totalorder %s270, %s286
      %p288 = scmp.eq.s32.totalorder %s26, 0
      %p289 = por %p287, %p288
      %p290 = scmp.le.s32.totalorder 1, %s20
      %p291 = scmp.lt.s32.totalorder %s20, 3
      %p292 = pnand %p290, %p291
      %p293 = pneg %p292
      // Predicated region
      $region9: #{simple_mlp_deeper.1} parent=5 // pred_check
        _
      $region10: #{simple_mlp_deeper.1} parent=5 // pred_check_branch
        %295 = sbr.rel (%p292) target = $region12
      $region11: #{simple_mlp_deeper.1} parent=5 // pred_region
        %s296 = ssub.s32 %s20, 1
        // Predicated region
        $region13: #{simple_mlp_deeper.1} parent=11 // pred_check
          %p297 = pneg %p67
        $region14: #{simple_mlp_deeper.1} parent=11 // pred_check_branch
          %299 = sbr.rel (%p297) target = $region16
        $region15: #{simple_mlp_deeper.1} parent=11 // pred_region
          _
        $region16: #{simple_mlp_deeper.1} parent=11 // pred_fallthru
          _
        // Predicated region
        $region17: #{simple_mlp_deeper.1} parent=11 // pred_check
          %p300 = pneg %p88
        $region18: #{simple_mlp_deeper.1} parent=11 // pred_check_branch
          %302 = sbr.rel (%p300) target = $region20
        $region19: #{simple_mlp_deeper.1} parent=11 // pred_region
          _
        $region20: #{simple_mlp_deeper.1} parent=11 // pred_fallthru
          _
        // Predicated region
        $region21: #{simple_mlp_deeper.1} parent=11 // pred_check
          %p303 = pneg %p109
        $region22: #{simple_mlp_deeper.1} parent=11 // pred_check_branch
          %305 = sbr.rel (%p303) target = $region24
        $region23: #{simple_mlp_deeper.1} parent=11 // pred_region
          %307 = vsyncadd [#allocation3], 0
          %s308 = sshll.u32 %s3, 4
          %s309 = int_to_ptr.hbm [resolvable:$true] %s308
          %s310 = sshll.u32 [#allocation2], 4
          %s311 = int_to_ptr.vmem [resolvable:$true] %s310
          %316 = dma.hbm_to_vmem [thread:$0]  %s309, 1024, %s311, [#allocation3], 64, 64, 4
        $region24: #{simple_mlp_deeper.1} parent=11 // pred_fallthru
          _
        // Predicated region
        $region25: #{simple_mlp_deeper.1} parent=11 // pred_check
          %p317 = pneg %p130
        $region26: #{simple_mlp_deeper.1} parent=11 // pred_check_branch
          %319 = sbr.rel (%p317) target = $region28
        $region27: #{simple_mlp_deeper.1} parent=11 // pred_region
          _
        $region28: #{simple_mlp_deeper.1} parent=11 // pred_fallthru
          _
        // Predicated region
        $region29: #{simple_mlp_deeper.1} parent=11 // pred_check
          %p320 = pneg %p151
        $region30: #{simple_mlp_deeper.1} parent=11 // pred_check_branch
          %322 = sbr.rel (%p320) target = $region32
        $region31: #{simple_mlp_deeper.1} parent=11 // pred_region
          %324 = vsyncadd [#allocation5], 0
          %s325 = sshll.u32 %s5, 4
          %s326 = int_to_ptr.hbm [resolvable:$true] %s325
          %s327 = sshll.u32 [#allocation4], 4
          %s328 = int_to_ptr.vmem [resolvable:$true] %s327
          %333 = dma.hbm_to_vmem [thread:$0]  %s326, 1024, %s328, [#allocation5], 64, 64, 4
        $region32: #{simple_mlp_deeper.1} parent=11 // pred_fallthru
          _
        // Predicated region
        $region33: #{simple_mlp_deeper.1} parent=11 // pred_check
          %p334 = pneg %p172
        $region34: #{simple_mlp_deeper.1} parent=11 // pred_check_branch
          %336 = sbr.rel (%p334) target = $region36
        $region35: #{simple_mlp_deeper.1} parent=11 // pred_region
          _
        $region36: #{simple_mlp_deeper.1} parent=11 // pred_fallthru
          _
        // Predicated region
        $region37: #{simple_mlp_deeper.1} parent=11 // pred_check
          %p337 = pneg %p193
        $region38: #{simple_mlp_deeper.1} parent=11 // pred_check_branch
          %339 = sbr.rel (%p337) target = $region40
        $region39: #{simple_mlp_deeper.1} parent=11 // pred_region
          %341 = vsyncadd [#allocation5], 0
          %s342 = sshll.u32 %s7, 4
          %s343 = int_to_ptr.hbm [resolvable:$true] %s342
          %s344 = sshll.u32 [#allocation6], 4
          %s345 = int_to_ptr.vmem [resolvable:$true] %s344
          %350 = dma.hbm_to_vmem [thread:$0]  %s343, 1024, %s345, [#allocation5], 64, 64, 4
        $region40: #{simple_mlp_deeper.1} parent=11 // pred_fallthru
          _
        // Predicated region
        $region41: #{simple_mlp_deeper.1} parent=11 // pred_check
          %p351 = pneg %p214
        $region42: #{simple_mlp_deeper.1} parent=11 // pred_check_branch
          %353 = sbr.rel (%p351) target = $region44
        $region43: #{simple_mlp_deeper.1} parent=11 // pred_region
          _
        $region44: #{simple_mlp_deeper.1} parent=11 // pred_fallthru
          _
        // Predicated region
        $region45: #{simple_mlp_deeper.1} parent=11 // pred_check
          %p354 = pneg %p235
        $region46: #{simple_mlp_deeper.1} parent=11 // pred_check_branch
          %356 = sbr.rel (%p354) target = $region48
        $region47: #{simple_mlp_deeper.1} parent=11 // pred_region
          %358 = vsyncadd [#allocation8], 0
          %s359 = sshll.u32 %s9, 4
          %s360 = int_to_ptr.hbm [resolvable:$true] %s359
          %s361 = sshll.u32 [#allocation7], 4
          %s362 = int_to_ptr.vmem [resolvable:$true] %s361
          %367 = dma.hbm_to_vmem [thread:$0]  %s360, 1024, %s362, [#allocation8], 64, 64, 4
        $region48: #{simple_mlp_deeper.1} parent=11 // pred_fallthru
          _
        // Predicated region
        $region49: #{simple_mlp_deeper.1} parent=11 // pred_check
          %p368 = pneg %p256
        $region50: #{simple_mlp_deeper.1} parent=11 // pred_check_branch
          %370 = sbr.rel (%p368) target = $region52
        $region51: #{simple_mlp_deeper.1} parent=11 // pred_region
          _
        $region52: #{simple_mlp_deeper.1} parent=11 // pred_fallthru
          _
      $region12: #{simple_mlp_deeper.1} parent=5 // pred_fallthru
        _
      %p371 = scmp.lt.s32.totalorder %s20, 2
      // Predicated region
      $region53: #{simple_mlp_deeper.1} parent=5 // pred_check
        %p372 = pneg %p371
      $region54: #{simple_mlp_deeper.1} parent=5 // pred_check_branch
        %374 = sbr.rel (%p372) target = $region56
      $region55: #{simple_mlp_deeper.1} parent=5 // pred_region
        // Predicated region
        $region57: #{simple_mlp_deeper.1} parent=55 // pred_check
          %p375 = pneg %p40
        $region58: #{simple_mlp_deeper.1} parent=55 // pred_check_branch
          %377 = sbr.rel (%p375) target = $region60
        $region59: #{simple_mlp_deeper.1} parent=55 // pred_region
          %p378 = scmp.lt.s32.totalorder %s20, 1
          %s379 = scalar_select %p378, %s20, 1
          %s380 = smul.addr %s379, 4
          %s381 = scalar_lea.vmem %s0, %s380
        $region60: #{simple_mlp_deeper.1} parent=55 // pred_fallthru
          _
      $region56: #{simple_mlp_deeper.1} parent=5 // pred_fallthru
        _
      %p382 = scmp.le.s32.totalorder 1, %s20
      %p383 = scmp.lt.s32.totalorder %s20, 3
      %p384 = pnand %p382, %p383
      %p385 = pneg %p384
      // Predicated region
      $region61: #{simple_mlp_deeper.1} parent=5 // pred_check
        _
      $region62: #{simple_mlp_deeper.1} parent=5 // pred_check_branch
        %387 = sbr.rel (%p384) target = $region64
      $region63: #{simple_mlp_deeper.1} parent=5 // pred_region
        %s388 = ssub.s32 %s20, 1
        // Predicated region
        $region65: #{simple_mlp_deeper.1} parent=63 // pred_check
          %p389 = pneg %p109
        $region66: #{simple_mlp_deeper.1} parent=63 // pred_check_branch
          %391 = sbr.rel (%p389) target = $region68
        $region67: #{simple_mlp_deeper.1} parent=63 // pred_region
          %393 = dma.done [#allocation3], 1024
        $region68: #{simple_mlp_deeper.1} parent=63 // pred_fallthru
          _
        // Predicated region
        $region69: #{simple_mlp_deeper.1} parent=63 // pred_check
          %p394 = pneg %p151
        $region70: #{simple_mlp_deeper.1} parent=63 // pred_check_branch
          %396 = sbr.rel (%p394) target = $region72
        $region71: #{simple_mlp_deeper.1} parent=63 // pred_region
          %398 = dma.done [#allocation5], 1024
        $region72: #{simple_mlp_deeper.1} parent=63 // pred_fallthru
          _
        // Predicated region
        $region73: #{simple_mlp_deeper.1} parent=63 // pred_check
          %p399 = pneg %p193
        $region74: #{simple_mlp_deeper.1} parent=63 // pred_check_branch
          %401 = sbr.rel (%p399) target = $region76
        $region75: #{simple_mlp_deeper.1} parent=63 // pred_region
          %403 = dma.done [#allocation5], 1024
        $region76: #{simple_mlp_deeper.1} parent=63 // pred_fallthru
          _
        // Predicated region
        $region77: #{simple_mlp_deeper.1} parent=63 // pred_check
          %p404 = pneg %p235
        $region78: #{simple_mlp_deeper.1} parent=63 // pred_check_branch
          %406 = sbr.rel (%p404) target = $region80
        $region79: #{simple_mlp_deeper.1} parent=63 // pred_region
          %408 = dma.done [#allocation8], 1024
        $region80: #{simple_mlp_deeper.1} parent=63 // pred_fallthru
          _
        %p409 = scmp.lt.s32.totalorder %s25, 1
        %s410 = scalar_select %p409, %s25, 1
        %s411 = smul.addr %s410, 4
        %s412 = scalar_lea.vmem %s0, %s411
        %p413 = pneg %p46
        %p414 = pneg %p43
        %p415 = pneg %p67
        %p416 = pneg %p64
        %p417 = pneg %p88
        %p418 = pneg %p85
        %p419 = pneg %p109
        %p420 = pneg %p106
        %p421 = pneg %p130
        %p422 = pneg %p127
        %p423 = pneg %p151
        %p424 = pneg %p148
        %p425 = pneg %p172
        %p426 = pneg %p169
        %p427 = pneg %p193
        %p428 = pneg %p190
        %p429 = pneg %p214
        %p430 = pneg %p211
        %p431 = pneg %p235
        %p432 = pneg %p232
        %p433 = pneg %p256
        %p434 = pneg %p253
        %p435 = pneg %p282
        %p436 = pneg %p279
        %p437 = scmp.lt.s32.totalorder %s25, 1
        %s438 = scalar_select %p437, %s25, 1
        %s439 = smul.addr %s438, 8
        %s440 = scalar_lea.vmem %s11, %s439
        %p441 = scmp.lt.s32.totalorder %s25, 1
        %s442 = scalar_select %p441, %s25, 1
        %s443 = smul.addr %s442, 4
        %s444 = scalar_lea.vmem %s0, %s443
        %p445 = scmp.lt.s32.totalorder %s25, 1
        %s446 = scalar_select %p445, %s25, 1
        %s447 = smul.addr %s446, 8
        %s448 = scalar_lea.vmem %s11, %s447
        %v450 = vld [vmem:[%s444] sm:$0xf]
        %v451 = vld [vmem:[%s1] sm:$0xf]
        %v452 = vld [vmem:[%s1 + $0x4] sm:$0xf]
        %v453 = vld [vmem:[%s2] sm:$0x1]
        %v455 = vperm.slane %v453, 0
        %v459 = vunpack.c.l.b16 %v451
        %v460 = vunpack.c.l.b16 %v452
        %v461 = vpack.c.b16 %v460, %v459
        %vm463 = vcmask 130048
        %v465 = vsel %vm463, %v450, 0
        %467 = vmatpush.bf16.msra.mxu0 0
        %468 = vmatpush.bf16.msra.mxu0 0
        %469 = vmatpush.bf16.msra.mxu0 0
        %470 = vmatpush.bf16.msra.mxu0 0
        %471 = vmatpush.bf16.msra.mxu0 0
        %472 = vmatpush.bf16.msra.mxu0 0
        %473 = vmatpush.bf16.msra.mxu0 0
        %474 = vmatpush.bf16.msra.mxu0 %v461
        %475 = vmatmul.bf16.gmra.mxu0 %v465
        %v476 = vpop.f32.mrf.mxu0
        %v477 = vadd.f32 %v455, %v476
        %v478 = vpop.f32.mrf.mxu0
        %479 = vdwg.mxu0
        %v480 = vmul.f32 %v477, %v477
        %v481 = vmul.f32 %v477, 0.7978846
        %v482 = vmul.f32 %v480, 0.044715
        %v483 = vadd.f32 %v482, 1.0
        %v484 = vmul.f32 %v481, %v483
        %v485 = vtanh.pop %v484
        %v486 = vadd.f32 %v485, 1.0
        %v487 = vmul.f32 %v477, %v486
        %v488 = vpack.c.bf16 %v487, %v487
        %v489 = vld [vmem:[#allocation2] sm:$0xf]
        %v490 = vld [vmem:[#allocation2 + $0x4] sm:$0xf]
        %v491 = vld [vmem:[#allocation2 + $0x8] sm:$0xf]
        %v492 = vld [vmem:[#allocation2 + $0xc] sm:$0xf]
        %v493 = vld [vmem:[#allocation2 + $0x10] sm:$0xf]
        %v494 = vld [vmem:[#allocation2 + $0x14] sm:$0xf]
        %v495 = vld [vmem:[#allocation2 + $0x18] sm:$0xf]
        %v496 = vld [vmem:[#allocation2 + $0x1c] sm:$0xf]
        %v497 = vld [vmem:[#allocation2 + $0x20] sm:$0xf]
        %v498 = vld [vmem:[#allocation2 + $0x24] sm:$0xf]
        %v499 = vld [vmem:[#allocation2 + $0x28] sm:$0xf]
        %v500 = vld [vmem:[#allocation2 + $0x2c] sm:$0xf]
        %v501 = vld [vmem:[#allocation2 + $0x30] sm:$0xf]
        %v502 = vld [vmem:[#allocation2 + $0x34] sm:$0xf]
        %v503 = vld [vmem:[#allocation2 + $0x38] sm:$0xf]
        %v504 = vld [vmem:[#allocation2 + $0x3c] sm:$0xf]
        %v505 = vld [vmem:[%s4] sm:$0x1]
        %v507 = vperm.slane %v505, 0
        %v525 = vunpack.c.l.b16 %v489
        %v526 = vunpack.c.l.b16 %v490
        %v527 = vunpack.c.l.b16 %v491
        %v528 = vunpack.c.l.b16 %v492
        %v529 = vunpack.c.l.b16 %v493
        %v530 = vunpack.c.l.b16 %v494
        %v531 = vunpack.c.l.b16 %v495
        %v532 = vunpack.c.l.b16 %v496
        %v533 = vunpack.c.l.b16 %v497
        %v534 = vunpack.c.l.b16 %v498
        %v535 = vunpack.c.l.b16 %v499
        %v536 = vunpack.c.l.b16 %v500
        %v537 = vunpack.c.l.b16 %v501
        %v538 = vunpack.c.l.b16 %v502
        %v539 = vunpack.c.l.b16 %v503
        %v540 = vunpack.c.l.b16 %v504
        %v541 = vpack.c.b16 %v526, %v525
        %v542 = vpack.c.b16 %v528, %v527
        %v543 = vpack.c.b16 %v530, %v529
        %v544 = vpack.c.b16 %v532, %v531
        %v545 = vpack.c.b16 %v534, %v533
        %v546 = vpack.c.b16 %v536, %v535
        %v547 = vpack.c.b16 %v538, %v537
        %v548 = vpack.c.b16 %v540, %v539
        %557 = vmatpush.bf16.msra.mxu0 %v548
        %558 = vmatpush.bf16.msra.mxu0 %v547
        %559 = vmatpush.bf16.msra.mxu0 %v546
        %560 = vmatpush.bf16.msra.mxu0 %v545
        %561 = vmatpush.bf16.msra.mxu0 %v544
        %562 = vmatpush.bf16.msra.mxu0 %v543
        %563 = vmatpush.bf16.msra.mxu0 %v542
        %564 = vmatpush.bf16.msra.mxu0 %v541
        %565 = vmatmul.bf16.gmra.mxu0 %v488
        %v566 = vpop.f32.mrf.mxu0
        %v567 = vadd.f32 %v507, %v566
        %v568 = vpop.f32.mrf.mxu0
        %569 = vdwg.mxu0
        %v570 = vmul.f32 %v567, %v567
        %v571 = vmul.f32 %v567, 0.7978846
        %v572 = vmul.f32 %v570, 0.044715
        %v573 = vadd.f32 %v572, 1.0
        %v574 = vmul.f32 %v571, %v573
        %v575 = vtanh.pop %v574
        %v576 = vadd.f32 %v575, 1.0
        %v577 = vmul.f32 %v567, %v576
        %v578 = vpack.c.bf16 %v577, %v577
        %v579 = vld [vmem:[#allocation4] sm:$0xf]
        %v580 = vld [vmem:[#allocation4 + $0x4] sm:$0xf]
        %v581 = vld [vmem:[#allocation4 + $0x8] sm:$0xf]
        %v582 = vld [vmem:[#allocation4 + $0xc] sm:$0xf]
        %v583 = vld [vmem:[#allocation4 + $0x10] sm:$0xf]
        %v584 = vld [vmem:[#allocation4 + $0x14] sm:$0xf]
        %v585 = vld [vmem:[#allocation4 + $0x18] sm:$0xf]
        %v586 = vld [vmem:[#allocation4 + $0x1c] sm:$0xf]
        %v587 = vld [vmem:[#allocation4 + $0x20] sm:$0xf]
        %v588 = vld [vmem:[#allocation4 + $0x24] sm:$0xf]
        %v589 = vld [vmem:[#allocation4 + $0x28] sm:$0xf]
        %v590 = vld [vmem:[#allocation4 + $0x2c] sm:$0xf]
        %v591 = vld [vmem:[#allocation4 + $0x30] sm:$0xf]
        %v592 = vld [vmem:[#allocation4 + $0x34] sm:$0xf]
        %v593 = vld [vmem:[#allocation4 + $0x38] sm:$0xf]
        %v594 = vld [vmem:[#allocation4 + $0x3c] sm:$0xf]
        %v595 = vld [vmem:[%s6] sm:$0x1]
        %v597 = vperm.slane %v595, 0
        %v615 = vunpack.c.l.b16 %v579
        %v616 = vunpack.c.l.b16 %v580
        %v617 = vunpack.c.l.b16 %v581
        %v618 = vunpack.c.l.b16 %v582
        %v619 = vunpack.c.l.b16 %v583
        %v620 = vunpack.c.l.b16 %v584
        %v621 = vunpack.c.l.b16 %v585
        %v622 = vunpack.c.l.b16 %v586
        %v623 = vunpack.c.l.b16 %v587
        %v624 = vunpack.c.l.b16 %v588
        %v625 = vunpack.c.l.b16 %v589
        %v626 = vunpack.c.l.b16 %v590
        %v627 = vunpack.c.l.b16 %v591
        %v628 = vunpack.c.l.b16 %v592
        %v629 = vunpack.c.l.b16 %v593
        %v630 = vunpack.c.l.b16 %v594
        %v631 = vpack.c.b16 %v616, %v615
        %v632 = vpack.c.b16 %v618, %v617
        %v633 = vpack.c.b16 %v620, %v619
        %v634 = vpack.c.b16 %v622, %v621
        %v635 = vpack.c.b16 %v624, %v623
        %v636 = vpack.c.b16 %v626, %v625
        %v637 = vpack.c.b16 %v628, %v627
        %v638 = vpack.c.b16 %v630, %v629
        %647 = vmatpush.bf16.msra.mxu0 %v638
        %648 = vmatpush.bf16.msra.mxu0 %v637
        %649 = vmatpush.bf16.msra.mxu0 %v636
        %650 = vmatpush.bf16.msra.mxu0 %v635
        %651 = vmatpush.bf16.msra.mxu0 %v634
        %652 = vmatpush.bf16.msra.mxu0 %v633
        %653 = vmatpush.bf16.msra.mxu0 %v632
        %654 = vmatpush.bf16.msra.mxu0 %v631
        %655 = vmatmul.bf16.gmra.mxu0 %v578
        %v656 = vpop.f32.mrf.mxu0
        %v657 = vadd.f32 %v597, %v656
        %v658 = vpop.f32.mrf.mxu0
        %659 = vdwg.mxu0
        %v660 = vmul.f32 %v657, %v657
        %v661 = vmul.f32 %v657, 0.7978846
        %v662 = vmul.f32 %v660, 0.044715
        %v663 = vadd.f32 %v662, 1.0
        %v664 = vmul.f32 %v661, %v663
        %v665 = vtanh.pop %v664
        %v666 = vadd.f32 %v665, 1.0
        %v667 = vmul.f32 %v657, %v666
        %v668 = vpack.c.bf16 %v667, %v667
        %v669 = vld [vmem:[#allocation6] sm:$0xf]
        %v670 = vld [vmem:[#allocation6 + $0x4] sm:$0xf]
        %v671 = vld [vmem:[#allocation6 + $0x8] sm:$0xf]
        %v672 = vld [vmem:[#allocation6 + $0xc] sm:$0xf]
        %v673 = vld [vmem:[#allocation6 + $0x10] sm:$0xf]
        %v674 = vld [vmem:[#allocation6 + $0x14] sm:$0xf]
        %v675 = vld [vmem:[#allocation6 + $0x18] sm:$0xf]
        %v676 = vld [vmem:[#allocation6 + $0x1c] sm:$0xf]
        %v677 = vld [vmem:[#allocation6 + $0x20] sm:$0xf]
        %v678 = vld [vmem:[#allocation6 + $0x24] sm:$0xf]
        %v679 = vld [vmem:[#allocation6 + $0x28] sm:$0xf]
        %v680 = vld [vmem:[#allocation6 + $0x2c] sm:$0xf]
        %v681 = vld [vmem:[#allocation6 + $0x30] sm:$0xf]
        %v682 = vld [vmem:[#allocation6 + $0x34] sm:$0xf]
        %v683 = vld [vmem:[#allocation6 + $0x38] sm:$0xf]
        %v684 = vld [vmem:[#allocation6 + $0x3c] sm:$0xf]
        %v685 = vld [vmem:[%s8] sm:$0x1]
        %v687 = vperm.slane %v685, 0
        %v705 = vunpack.c.l.b16 %v669
        %v706 = vunpack.c.l.b16 %v670
        %v707 = vunpack.c.l.b16 %v671
        %v708 = vunpack.c.l.b16 %v672
        %v709 = vunpack.c.l.b16 %v673
        %v710 = vunpack.c.l.b16 %v674
        %v711 = vunpack.c.l.b16 %v675
        %v712 = vunpack.c.l.b16 %v676
        %v713 = vunpack.c.l.b16 %v677
        %v714 = vunpack.c.l.b16 %v678
        %v715 = vunpack.c.l.b16 %v679
        %v716 = vunpack.c.l.b16 %v680
        %v717 = vunpack.c.l.b16 %v681
        %v718 = vunpack.c.l.b16 %v682
        %v719 = vunpack.c.l.b16 %v683
        %v720 = vunpack.c.l.b16 %v684
        %v721 = vpack.c.b16 %v706, %v705
        %v722 = vpack.c.b16 %v708, %v707
        %v723 = vpack.c.b16 %v710, %v709
        %v724 = vpack.c.b16 %v712, %v711
        %v725 = vpack.c.b16 %v714, %v713
        %v726 = vpack.c.b16 %v716, %v715
        %v727 = vpack.c.b16 %v718, %v717
        %v728 = vpack.c.b16 %v720, %v719
        %737 = vmatpush.bf16.msra.mxu0 %v728
        %738 = vmatpush.bf16.msra.mxu0 %v727
        %739 = vmatpush.bf16.msra.mxu0 %v726
        %740 = vmatpush.bf16.msra.mxu0 %v725
        %741 = vmatpush.bf16.msra.mxu0 %v724
        %742 = vmatpush.bf16.msra.mxu0 %v723
        %743 = vmatpush.bf16.msra.mxu0 %v722
        %744 = vmatpush.bf16.msra.mxu0 %v721
        %745 = vmatmul.bf16.gmra.mxu0 %v668
        %v746 = vpop.f32.mrf.mxu0
        %v747 = vadd.f32 %v687, %v746
        %v748 = vpop.f32.mrf.mxu0
        %749 = vdwg.mxu0
        %v750 = vmul.f32 %v747, %v747
        %v751 = vmul.f32 %v747, 0.7978846
        %v752 = vmul.f32 %v750, 0.044715
        %v753 = vadd.f32 %v752, 1.0
        %v754 = vmul.f32 %v751, %v753
        %v755 = vtanh.pop %v754
        %v756 = vadd.f32 %v755, 1.0
        %v757 = vmul.f32 %v747, %v756
        %v758 = vpack.c.bf16 %v757, %v757
        %v759 = vld [vmem:[#allocation7] sm:$0xf]
        %v760 = vld [vmem:[#allocation7 + $0x4] sm:$0xf]
        %v761 = vld [vmem:[#allocation7 + $0x8] sm:$0xf]
        %v762 = vld [vmem:[#allocation7 + $0xc] sm:$0xf]
        %v763 = vld [vmem:[#allocation7 + $0x10] sm:$0xf]
        %v764 = vld [vmem:[#allocation7 + $0x14] sm:$0xf]
        %v765 = vld [vmem:[#allocation7 + $0x18] sm:$0xf]
        %v766 = vld [vmem:[#allocation7 + $0x1c] sm:$0xf]
        %v767 = vld [vmem:[#allocation7 + $0x20] sm:$0xf]
        %v768 = vld [vmem:[#allocation7 + $0x24] sm:$0xf]
        %v769 = vld [vmem:[#allocation7 + $0x28] sm:$0xf]
        %v770 = vld [vmem:[#allocation7 + $0x2c] sm:$0xf]
        %v771 = vld [vmem:[#allocation7 + $0x30] sm:$0xf]
        %v772 = vld [vmem:[#allocation7 + $0x34] sm:$0xf]
        %v773 = vld [vmem:[#allocation7 + $0x38] sm:$0xf]
        %v774 = vld [vmem:[#allocation7 + $0x3c] sm:$0xf]
        %v775 = vld [vmem:[%s10] sm:$0x1]
        %v777 = vperm.slane %v775, 0
        %v795 = vunpack.c.l.b16 %v759
        %v796 = vunpack.c.l.b16 %v760
        %v797 = vunpack.c.l.b16 %v761
        %v798 = vunpack.c.l.b16 %v762
        %v799 = vunpack.c.l.b16 %v763
        %v800 = vunpack.c.l.b16 %v764
        %v801 = vunpack.c.l.b16 %v765
        %v802 = vunpack.c.l.b16 %v766
        %v803 = vunpack.c.l.b16 %v767
        %v804 = vunpack.c.l.b16 %v768
        %v805 = vunpack.c.l.b16 %v769
        %v806 = vunpack.c.l.b16 %v770
        %v807 = vunpack.c.l.b16 %v771
        %v808 = vunpack.c.l.b16 %v772
        %v809 = vunpack.c.l.b16 %v773
        %v810 = vunpack.c.l.b16 %v774
        %v811 = vpack.c.b16 %v796, %v795
        %v812 = vpack.c.b16 %v798, %v797
        %v813 = vpack.c.b16 %v800, %v799
        %v814 = vpack.c.b16 %v802, %v801
        %v815 = vpack.c.b16 %v804, %v803
        %v816 = vpack.c.b16 %v806, %v805
        %v817 = vpack.c.b16 %v808, %v807
        %v818 = vpack.c.b16 %v810, %v809
        %827 = vmatpush.bf16.msra.mxu0 %v818
        %828 = vmatpush.bf16.msra.mxu0 %v817
        %829 = vmatpush.bf16.msra.mxu0 %v816
        %830 = vmatpush.bf16.msra.mxu0 %v815
        %831 = vmatpush.bf16.msra.mxu0 %v814
        %832 = vmatpush.bf16.msra.mxu0 %v813
        %833 = vmatpush.bf16.msra.mxu0 %v812
        %834 = vmatpush.bf16.msra.mxu0 %v811
        %835 = vmatmul.bf16.gmra.mxu0 %v758
        %v836 = vpop.f32.mrf.mxu0
        %v837 = vadd.f32 %v777, %v836
        %v838 = vpop.f32.mrf.mxu0
        %839 = vdwg.mxu0
        %840 = vst [vmem:[%s448] sm:$0xff] %v837
        %p841 = scmp.lt.s32.totalorder %s25, 1
        %s842 = scalar_select %p841, %s25, 1
        %s843 = smul.addr %s842, 8
        %s844 = scalar_lea.vmem %s11, %s843
        // Predicated region
        $region81: #{simple_mlp_deeper.1} parent=63 // pred_check
          %p845 = pneg %p279
        $region82: #{simple_mlp_deeper.1} parent=63 // pred_check_branch
          %847 = sbr.rel (%p845) target = $region84
        $region83: #{simple_mlp_deeper.1} parent=63 // pred_region
          _
        $region84: #{simple_mlp_deeper.1} parent=63 // pred_fallthru
          _
      $region64: #{simple_mlp_deeper.1} parent=5 // pred_fallthru
        _
      %p848 = scmp.le.s32.totalorder 2, %s20
      // Predicated region
      $region85: #{simple_mlp_deeper.1} parent=5 // pred_check
        %p849 = pneg %p848
      $region86: #{simple_mlp_deeper.1} parent=5 // pred_check_branch
        %851 = sbr.rel (%p849) target = $region88
      $region87: #{simple_mlp_deeper.1} parent=5 // pred_region
        %s852 = ssub.s32 %s20, 2
        // Predicated region
        $region89: #{simple_mlp_deeper.1} parent=87 // pred_check
          %p853 = pneg %p285
        $region90: #{simple_mlp_deeper.1} parent=87 // pred_check_branch
          %855 = sbr.rel (%p853) target = $region92
        $region91: #{simple_mlp_deeper.1} parent=87 // pred_region
          %p856 = scmp.lt.s32.totalorder %s26, 1
          %s857 = scalar_select %p856, %s26, 1
          %s858 = smul.addr %s857, 8
          %s859 = scalar_lea.vmem %s11, %s858
        $region92: #{simple_mlp_deeper.1} parent=87 // pred_fallthru
          _
      $region88: #{simple_mlp_deeper.1} parent=5 // pred_fallthru
        _
    $region6: #{simple_mlp_deeper.1} parent=1 // loop_footer
      %s24 = sadd.s32 1, %s20
    $region7: #{simple_mlp_deeper.1} parent=1 // loop_footer_branch
      %19 = sbr.rel target = $region3
    $region8: #{simple_mlp_deeper.1} parent=1 // loop_exit
      _
    %860 = vsyncpa [#allocation3], 1
    %s861 = scalar_lea.sflag [#allocation3], 1
    %862 = vsyncpa %s861, 1
    %863 = vsyncpa [#allocation5], 1
    %864 = vsyncpa [#allocation8], 1

</llo_original>
